<compile_context>
chip_gen: v7x
topology: tpu7x:2x2x1
jax: 0.10.0
libtpu: 0.0.40
codegen_flags: <defaults>
</compile_context>

<pallas_src>
import math
from functools import partial

import jax
import jax.numpy as jnp
from jax import lax
from jax.experimental import pallas as pl
from jax.experimental.pallas import tpu as pltpu


# ----------------------------- Pallas kernel ------------------------------ #
def hybrid_kernel(x_ref, mask_ref,
                  ln1g_ref, ln1b_ref, w1_ref, b1_ref,
                  w2_ref, b2_ref, ln2g_ref, ln2b_ref,
                  w3_ref, b3_ref,
                  h_ref, last_ref, *, tb, n_hypers):
    """One grid step = TB batch elements.

    x_ref    : [TB, n_nodes, d]  (bf16)
    mask_ref : [K, n_nodes]      (f32)
    h_ref    : [TB*K, d]  f32 output; also reused as the MLP input slab
    last_ref : [TB*K, 1]  f32 output
    """
    m_f32 = mask_ref[...]
    inv_denom = pl.reciprocal(
        1e-7 + jnp.sum(m_f32, axis=-1, keepdims=True), approx=False)  # [K, 1]
    m_bf = m_f32.astype(jnp.bfloat16)

    # HyBRiDConstructor: masked mean pooling.  One small MXU matmul per batch
    # element, stored directly into the lane-dense [TB*K, d] output slab.
    # (For very large n_nodes, a node-chunk grid axis accumulating here would
    #  keep the x tile inside v7x's 64 MiB VMEM budget.)
    for b in range(tb):                                     # static unroll
        hb = jnp.dot(m_bf, x_ref[b], preferred_element_type=jnp.float32)
        h_ref[pl.ds(b * n_hypers, n_hypers), :] = hb * inv_denom

    def layer_norm(v, g, b, eps=1e-5):
        mu = jnp.mean(v, axis=-1, keepdims=True)
        var = jnp.mean(jnp.square(v - mu), axis=-1, keepdims=True)
        return (v - mu) * lax.rsqrt(var + eps) * g + b

    # HyBRiDWeighter.dim_reduction, fused over all TB*K rows of this tile.
    h = h_ref[...]                                          # [TB*K, d] f32
    z = layer_norm(h, ln1g_ref[...], ln1b_ref[...])
    z = jnp.dot(z.astype(jnp.bfloat16), w1_ref[...],
                preferred_element_type=jnp.float32) + b1_ref[...]
    # exact (erf-based) GELU, matching torch.nn.GELU default
    z = 0.5 * z * (1.0 + lax.erf(z * 0.7071067811865476))
    z = jnp.dot(z.astype(jnp.bfloat16), w2_ref[...],
                preferred_element_type=jnp.float32) + b2_ref[...]
    z = layer_norm(z, ln2g_ref[...], ln2b_ref[...])
    # Final per-hyperedge score kept in f32 (bounds bf16 drift).
    last_ref[...] = jnp.dot(z, w3_ref[...],
                            preferred_element_type=jnp.float32) + b3_ref[0, 0]


# ------------------------------ JAX wrapper -------------------------------- #
def masker_forward(mask_param, key):
    """mask_param: [n_hypers, n_nodes, 2] -> (mask [K,N], mask_logits [K,N])."""
    mask_logits = jax.nn.log_softmax(mask_param, axis=-1)
    g = jax.random.gumbel(key, mask_param.shape, dtype=mask_param.dtype)
    idx = jnp.argmax(mask_logits + g, axis=-1)      # tau = 1, hard = True (fwd)
    mask = (idx == 1).astype(mask_param.dtype)
    return mask, mask_logits[..., 1]


@partial(jax.jit, static_argnames=("batch_tile",))
def hybrid_pallas(x, params, gumbel_key, batch_tile=8):
    bs, n_nodes, d = x.shape
    mask, mask_logits = masker_forward(params["masker"], gumbel_key)
    K = mask.shape[0]
    hidden = params["w1"].shape[1]

    # Batch tiling: TB elements per grid step.  For v7x, pick batch_tile so
    # that n_tiles >= 2 to keep both TensorCores busy.
    tb = max(1, min(batch_tile, bs))
    n_tiles = pl.cdiv(bs, tb)
    bs_pad = n_tiles * tb

    x_bf = x.astype(jnp.bfloat16)                    # halves x HBM traffic
    if bs_pad != bs:
        x_bf = jnp.pad(x_bf, ((0, bs_pad - bs), (0, 0), (0, 0)))
    w1_bf = params["w1"].astype(jnp.bfloat16)
    w2_bf = params["w2"].astype(jnp.bfloat16)

    def full(shape):
        return pl.BlockSpec(shape, lambda b: (0,) * len(shape))

    h_flat, last_flat = pl.pallas_call(
        partial(hybrid_kernel, tb=tb, n_hypers=K),
        out_shape=(jax.ShapeDtypeStruct((bs_pad * K, d), jnp.float32),
                   jax.ShapeDtypeStruct((bs_pad * K, 1), jnp.float32)),
        grid=(n_tiles,),
        in_specs=[
            pl.BlockSpec((tb, n_nodes, d), lambda b: (b, 0, 0)),   # x tile
            full((K, n_nodes)),                                    # mask
            full((1, d)), full((1, d)),                            # LN1 gamma/beta
            full((d, hidden)), full((1, hidden)),                  # Linear1
            full((hidden, d)), full((1, d)),                       # Linear2
            full((1, d)), full((1, d)),                            # LN2 gamma/beta
            full((d, 1)), full((1, 1)),                            # Linear3 (d -> 1)
        ],
        out_specs=(pl.BlockSpec((tb * K, d), lambda b: (b, 0)),
                   pl.BlockSpec((tb * K, 1), lambda b: (b, 0))),
        compiler_params=pltpu.CompilerParams(
            dimension_semantics=("parallel",)),
    )(x_bf, mask,
      params["ln1_g"], params["ln1_b"], w1_bf, params["b1"],
      w2_bf, params["b2"], params["ln2_g"], params["ln2_b"],
      params["w3"], params["b3"])

    h = h_flat.reshape(bs_pad, K, d)[:bs]            # constructor output
    last = last_flat.reshape(bs_pad, K)[:bs]
    # HyBRiDWeighter.last : Linear(K, 1) -- trivial GEMV fused by XLA outside
    # the kernel (removes the per-step (1,1) masked store).
    preds = (last @ params["w_last"])[:, 0] + params["b_last"][0, 0]

    return {"preds": preds,                 # .squeeze() of [bs, 1]
            "h": h,                         # [bs, K, d] (dropout = identity)
            "last": last,                   # .detach() is a no-op in fwd
            "mask": mask,
            "mask_logits": mask_logits}


def init_params(key, n_hypers, hidden_size, n_nodes):
    d = n_nodes
    ks = jax.random.split(key, 8)
    xavier_std = math.sqrt(2.0 / (n_nodes * 2 + n_hypers * 2))   # xavier_normal on [K, N, 2]
    return {
        "masker": xavier_std * jax.random.normal(ks[0], (n_hypers, n_nodes, 2), jnp.float32),
        "ln1_g": jnp.ones((1, d), jnp.float32),
        "ln1_b": jnp.zeros((1, d), jnp.float32),
        "w1": 0.1 * jax.random.normal(ks[1], (d, hidden_size), jnp.float32),
        "b1": 0.1 * jax.random.normal(ks[2], (1, hidden_size), jnp.float32),
        "w2": 0.1 * jax.random.normal(ks[3], (hidden_size, d), jnp.float32),
        "b2": 0.1 * jax.random.normal(ks[4], (1, d), jnp.float32),
        "ln2_g": jnp.ones((1, d), jnp.float32),
        "ln2_b": jnp.zeros((1, d), jnp.float32),
        "w3": 0.1 * jax.random.normal(ks[5], (d, 1), jnp.float32),
        "b3": jnp.zeros((1, 1), jnp.float32),
        "w_last": 0.1 * jax.random.normal(ks[6], (n_hypers, 1), jnp.float32),
        "b_last": jnp.zeros((1, 1), jnp.float32),
    }


if __name__ == "__main__":
    key = jax.random.PRNGKey(0)
    k_x, k_p, k_g = jax.random.split(key, 3)

    batch, n_hypers, hidden_size, n_nodes = 2, 4, 32, 16
    x = jax.random.normal(k_x, (batch, n_nodes, n_nodes), jnp.float32)
    params = init_params(k_p, n_hypers, hidden_size, n_nodes)

    out = hybrid_pallas(x, params, k_g)
    jax.block_until_ready(out)

    assert out["preds"].shape == (batch,)
    assert out["h"].shape == (batch, n_hypers, n_nodes)
    assert out["last"].shape == (batch, n_hypers)
    assert out["mask"].shape == (n_hypers, n_nodes)
    assert out["mask_logits"].shape == (n_hypers, n_nodes)
    print("KERNEL_OK")
</pallas_src>

<mosaic_0001>
module attributes {stable_mosaic.version = 11 : i64} {
  func.func @hybrid_kernel(%arg0: i32, %arg1: memref<2x16x16xbf16, #tpu.memory_space<vmem>>, %arg2: memref<4x16xf32, #tpu.memory_space<vmem>>, %arg3: memref<1x16xf32, #tpu.memory_space<vmem>>, %arg4: memref<1x16xf32, #tpu.memory_space<vmem>>, %arg5: memref<16x32xbf16, #tpu.memory_space<vmem>>, %arg6: memref<1x32xf32, #tpu.memory_space<vmem>>, %arg7: memref<32x16xbf16, #tpu.memory_space<vmem>>, %arg8: memref<1x16xf32, #tpu.memory_space<vmem>>, %arg9: memref<1x16xf32, #tpu.memory_space<vmem>>, %arg10: memref<1x16xf32, #tpu.memory_space<vmem>>, %arg11: memref<16x1xf32, #tpu.memory_space<vmem>>, %arg12: memref<1x1xf32, #tpu.memory_space<vmem>>, %arg13: memref<8x16xf32, #tpu.memory_space<vmem>>, %arg14: memref<8x1xf32, #tpu.memory_space<vmem>>) attributes {dimension_semantics = [#tpu.dimension_semantics<parallel>], iteration_bounds = array<i64: 1>, scalar_prefetch = 0 : i64, scratch_operands = 0 : i64, tpu.core_type = #tpu.core_type<tc>, window_params = [{transform_indices = @transform_0, window_bounds = array<i64: 2, 16, 16>}, {pipeline_mode = #tpu.pipeline_mode<synchronous>, transform_indices = @transform_1, window_bounds = array<i64: 4, 16>}, {pipeline_mode = #tpu.pipeline_mode<synchronous>, transform_indices = @transform_2, window_bounds = array<i64: 1, 16>}, {pipeline_mode = #tpu.pipeline_mode<synchronous>, transform_indices = @transform_3, window_bounds = array<i64: 1, 16>}, {pipeline_mode = #tpu.pipeline_mode<synchronous>, transform_indices = @transform_4, window_bounds = array<i64: 16, 32>}, {pipeline_mode = #tpu.pipeline_mode<synchronous>, transform_indices = @transform_5, window_bounds = array<i64: 1, 32>}, {pipeline_mode = #tpu.pipeline_mode<synchronous>, transform_indices = @transform_6, window_bounds = array<i64: 32, 16>}, {pipeline_mode = #tpu.pipeline_mode<synchronous>, transform_indices = @transform_7, window_bounds = array<i64: 1, 16>}, {pipeline_mode = #tpu.pipeline_mode<synchronous>, transform_indices = @transform_8, window_bounds = array<i64: 1, 16>}, {pipeline_mode = #tpu.pipeline_mode<synchronous>, transform_indices = @transform_9, window_bounds = array<i64: 1, 16>}, {pipeline_mode = #tpu.pipeline_mode<synchronous>, transform_indices = @transform_10, window_bounds = array<i64: 16, 1>}, {pipeline_mode = #tpu.pipeline_mode<synchronous>, transform_indices = @transform_11, window_bounds = array<i64: 1, 1>}, {transform_indices = @transform_12, window_bounds = array<i64: 8, 16>}, {transform_indices = @transform_13, window_bounds = array<i64: 8, 1>}]} {
    %c0 = arith.constant 0 : index
    %c0_0 = arith.constant 0 : index
    %0 = vector.load %arg2[%c0, %c0_0] : memref<4x16xf32, #tpu.memory_space<vmem>>, vector<4x16xf32>
    %cst = arith.constant dense<0.000000e+00> : vector<4xf32>
    %1 = vector.multi_reduction <add>, %0, %cst [1] : vector<4x16xf32> to vector<4xf32>
    %2 = vector.shape_cast %1 : vector<4xf32> to vector<4x1xf32>
    %cst_1 = arith.constant 1.000000e-07 : f32
    %3 = vector.broadcast %cst_1 : f32 to vector<4x1xf32>
    %4 = arith.addf %3, %2 : vector<4x1xf32>
    %5 = tpu.reciprocal %4 : vector<4x1xf32> -> vector<4x1xf32>
    %6 = arith.truncf %0 : vector<4x16xf32> to vector<4x16xbf16>
    %c0_2 = arith.constant 0 : index
    %c0_3 = arith.constant 0 : index
    %c0_4 = arith.constant 0 : index
    %7 = vector.load %arg1[%c0_2, %c0_3, %c0_4] : memref<2x16x16xbf16, #tpu.memory_space<vmem>>, vector<1x16x16xbf16>
    %8 = vector.shape_cast %7 : vector<1x16x16xbf16> to vector<16x16xbf16>
    %cst_5 = arith.constant dense<0.000000e+00> : vector<4x16xf32>
    %9 = tpu.matmul %6, %8, %cst_5 {dimension_numbers = #tpu.dot_dimension_numbers<[1], [0], [0], [1], [0, 0, 1, 1], [], []>} : vector<4x16xbf16>, vector<16x16xbf16>, vector<4x16xf32> -> vector<4x16xf32>
    %10 = vector.broadcast %5 : vector<4x1xf32> to vector<4x16xf32>
    %11 = arith.mulf %9, %10 : vector<4x16xf32>
    %c0_6 = arith.constant 0 : index
    %c0_7 = arith.constant 0 : index
    %12 = vector.load %arg13[%c0_6, %c0_7] : memref<8x16xf32, #tpu.memory_space<vmem>>, vector<4x16xf32>
    tpu.vector_store %arg13[%c0_6, %c0_7], %11 {strides = array<i32>} : memref<8x16xf32, #tpu.memory_space<vmem>>, vector<4x16xf32>,
    %c1 = arith.constant 1 : index
    %c0_8 = arith.constant 0 : index
    %c0_9 = arith.constant 0 : index
    %13 = vector.load %arg1[%c1, %c0_8, %c0_9] : memref<2x16x16xbf16, #tpu.memory_space<vmem>>, vector<1x16x16xbf16>
    %14 = vector.shape_cast %13 : vector<1x16x16xbf16> to vector<16x16xbf16>
    %cst_10 = arith.constant dense<0.000000e+00> : vector<4x16xf32>
    %15 = tpu.matmul %6, %14, %cst_10 {dimension_numbers = #tpu.dot_dimension_numbers<[1], [0], [0], [1], [0, 0, 1, 1], [], []>} : vector<4x16xbf16>, vector<16x16xbf16>, vector<4x16xf32> -> vector<4x16xf32>
    %16 = vector.broadcast %5 : vector<4x1xf32> to vector<4x16xf32>
    %17 = arith.mulf %15, %16 : vector<4x16xf32>
    %c4 = arith.constant 4 : index
    %c0_11 = arith.constant 0 : index
    %18 = vector.load %arg13[%c4, %c0_11] : memref<8x16xf32, #tpu.memory_space<vmem>>, vector<4x16xf32>
    tpu.vector_store %arg13[%c4, %c0_11], %17 {strides = array<i32>} : memref<8x16xf32, #tpu.memory_space<vmem>>, vector<4x16xf32>,
    %c0_12 = arith.constant 0 : index
    %c0_13 = arith.constant 0 : index
    %19 = vector.load %arg13[%c0_12, %c0_13] : memref<8x16xf32, #tpu.memory_space<vmem>>, vector<8x16xf32>
    %c0_14 = arith.constant 0 : index
    %c0_15 = arith.constant 0 : index
    %20 = vector.load %arg3[%c0_14, %c0_15] : memref<1x16xf32, #tpu.memory_space<vmem>>, vector<1x16xf32>
    %c0_16 = arith.constant 0 : index
    %c0_17 = arith.constant 0 : index
    %21 = vector.load %arg4[%c0_16, %c0_17] : memref<1x16xf32, #tpu.memory_space<vmem>>, vector<1x16xf32>
    %cst_18 = arith.constant dense<0.000000e+00> : vector<8xf32>
    %22 = vector.multi_reduction <add>, %19, %cst_18 [1] : vector<8x16xf32> to vector<8xf32>
    %23 = vector.shape_cast %22 : vector<8xf32> to vector<8x1xf32>
    %cst_19 = arith.constant 1.600000e+01 : f32
    %24 = vector.broadcast %cst_19 : f32 to vector<8x1xf32>
    %25 = arith.divf %23, %24 : vector<8x1xf32>
    %26 = vector.broadcast %25 : vector<8x1xf32> to vector<8x16xf32>
    %27 = arith.subf %19, %26 : vector<8x16xf32>
    %28 = arith.mulf %27, %27 : vector<8x16xf32>
    %cst_20 = arith.constant dense<0.000000e+00> : vector<8xf32>
    %29 = vector.multi_reduction <add>, %28, %cst_20 [1] : vector<8x16xf32> to vector<8xf32>
    %30 = vector.shape_cast %29 : vector<8xf32> to vector<8x1xf32>
    %cst_21 = arith.constant 1.600000e+01 : f32
    %31 = vector.broadcast %cst_21 : f32 to vector<8x1xf32>
    %32 = arith.divf %30, %31 : vector<8x1xf32>
    %33 = vector.broadcast %25 : vector<8x1xf32> to vector<8x16xf32>
    %34 = arith.subf %19, %33 : vector<8x16xf32>
    %cst_22 = arith.constant 9.99999974E-6 : f32
    %35 = vector.broadcast %cst_22 : f32 to vector<8x1xf32>
    %36 = arith.addf %32, %35 : vector<8x1xf32>
    %37 = math.rsqrt %36 : vector<8x1xf32>
    %38 = vector.broadcast %37 : vector<8x1xf32> to vector<8x16xf32>
    %39 = arith.mulf %34, %38 : vector<8x16xf32>
    %40 = vector.broadcast %20 : vector<1x16xf32> to vector<8x16xf32>
    %41 = arith.mulf %39, %40 : vector<8x16xf32>
    %42 = vector.broadcast %21 : vector<1x16xf32> to vector<8x16xf32>
    %43 = arith.addf %41, %42 : vector<8x16xf32>
    %44 = arith.truncf %43 : vector<8x16xf32> to vector<8x16xbf16>
    %c0_23 = arith.constant 0 : index
    %c0_24 = arith.constant 0 : index
    %45 = vector.load %arg5[%c0_23, %c0_24] : memref<16x32xbf16, #tpu.memory_space<vmem>>, vector<16x32xbf16>
    %cst_25 = arith.constant dense<0.000000e+00> : vector<8x32xf32>
    %46 = tpu.matmul %44, %45, %cst_25 {dimension_numbers = #tpu.dot_dimension_numbers<[1], [0], [0], [1], [0, 0, 1, 1], [], []>} : vector<8x16xbf16>, vector<16x32xbf16>, vector<8x32xf32> -> vector<8x32xf32>
    %c0_26 = arith.constant 0 : index
    %c0_27 = arith.constant 0 : index
    %47 = vector.load %arg6[%c0_26, %c0_27] : memref<1x32xf32, #tpu.memory_space<vmem>>, vector<1x32xf32>
    %48 = vector.broadcast %47 : vector<1x32xf32> to vector<8x32xf32>
    %49 = arith.addf %46, %48 : vector<8x32xf32>
    %cst_28 = arith.constant 5.000000e-01 : f32
    %50 = vector.broadcast %cst_28 : f32 to vector<8x32xf32>
    %51 = arith.mulf %50, %49 : vector<8x32xf32>
    %cst_29 = arith.constant 0.707106769 : f32
    %52 = vector.broadcast %cst_29 : f32 to vector<8x32xf32>
    %53 = arith.mulf %49, %52 : vector<8x32xf32>
    %54 = math.erf %53 : vector<8x32xf32>
    %cst_30 = arith.constant 1.000000e+00 : f32
    %55 = vector.broadcast %cst_30 : f32 to vector<8x32xf32>
    %56 = arith.addf %55, %54 : vector<8x32xf32>
    %57 = arith.mulf %51, %56 : vector<8x32xf32>
    %58 = arith.truncf %57 : vector<8x32xf32> to vector<8x32xbf16>
    %c0_31 = arith.constant 0 : index
    %c0_32 = arith.constant 0 : index
    %59 = vector.load %arg7[%c0_31, %c0_32] : memref<32x16xbf16, #tpu.memory_space<vmem>>, vector<32x16xbf16>
    %cst_33 = arith.constant dense<0.000000e+00> : vector<8x16xf32>
    %60 = tpu.matmul %58, %59, %cst_33 {dimension_numbers = #tpu.dot_dimension_numbers<[1], [0], [0], [1], [0, 0, 1, 1], [], []>} : vector<8x32xbf16>, vector<32x16xbf16>, vector<8x16xf32> -> vector<8x16xf32>
    %c0_34 = arith.constant 0 : index
    %c0_35 = arith.constant 0 : index
    %61 = vector.load %arg8[%c0_34, %c0_35] : memref<1x16xf32, #tpu.memory_space<vmem>>, vector<1x16xf32>
    %62 = vector.broadcast %61 : vector<1x16xf32> to vector<8x16xf32>
    %63 = arith.addf %60, %62 : vector<8x16xf32>
    %c0_36 = arith.constant 0 : index
    %c0_37 = arith.constant 0 : index
    %64 = vector.load %arg9[%c0_36, %c0_37] : memref<1x16xf32, #tpu.memory_space<vmem>>, vector<1x16xf32>
    %c0_38 = arith.constant 0 : index
    %c0_39 = arith.constant 0 : index
    %65 = vector.load %arg10[%c0_38, %c0_39] : memref<1x16xf32, #tpu.memory_space<vmem>>, vector<1x16xf32>
    %cst_40 = arith.constant dense<0.000000e+00> : vector<8xf32>
    %66 = vector.multi_reduction <add>, %63, %cst_40 [1] : vector<8x16xf32> to vector<8xf32>
    %67 = vector.shape_cast %66 : vector<8xf32> to vector<8x1xf32>
    %cst_41 = arith.constant 1.600000e+01 : f32
    %68 = vector.broadcast %cst_41 : f32 to vector<8x1xf32>
    %69 = arith.divf %67, %68 : vector<8x1xf32>
    %70 = vector.broadcast %69 : vector<8x1xf32> to vector<8x16xf32>
    %71 = arith.subf %63, %70 : vector<8x16xf32>
    %72 = arith.mulf %71, %71 : vector<8x16xf32>
    %cst_42 = arith.constant dense<0.000000e+00> : vector<8xf32>
    %73 = vector.multi_reduction <add>, %72, %cst_42 [1] : vector<8x16xf32> to vector<8xf32>
    %74 = vector.shape_cast %73 : vector<8xf32> to vector<8x1xf32>
    %cst_43 = arith.constant 1.600000e+01 : f32
    %75 = vector.broadcast %cst_43 : f32 to vector<8x1xf32>
    %76 = arith.divf %74, %75 : vector<8x1xf32>
    %77 = vector.broadcast %69 : vector<8x1xf32> to vector<8x16xf32>
    %78 = arith.subf %63, %77 : vector<8x16xf32>
    %cst_44 = arith.constant 9.99999974E-6 : f32
    %79 = vector.broadcast %cst_44 : f32 to vector<8x1xf32>
    %80 = arith.addf %76, %79 : vector<8x1xf32>
    %81 = math.rsqrt %80 : vector<8x1xf32>
    %82 = vector.broadcast %81 : vector<8x1xf32> to vector<8x16xf32>
    %83 = arith.mulf %78, %82 : vector<8x16xf32>
    %84 = vector.broadcast %64 : vector<1x16xf32> to vector<8x16xf32>
    %85 = arith.mulf %83, %84 : vector<8x16xf32>
    %86 = vector.broadcast %65 : vector<1x16xf32> to vector<8x16xf32>
    %87 = arith.addf %85, %86 : vector<8x16xf32>
    %c0_45 = arith.constant 0 : index
    %c0_46 = arith.constant 0 : index
    %88 = vector.load %arg11[%c0_45, %c0_46] : memref<16x1xf32, #tpu.memory_space<vmem>>, vector<16x1xf32>
    %cst_47 = arith.constant dense<0.000000e+00> : vector<8x1xf32>
    %89 = tpu.matmul %87, %88, %cst_47 {dimension_numbers = #tpu.dot_dimension_numbers<[1], [0], [0], [1], [0, 0, 1, 1], [], []>} : vector<8x16xf32>, vector<16x1xf32>, vector<8x1xf32> -> vector<8x1xf32>
    %c0_48 = arith.constant 0 : index
    %c0_49 = arith.constant 0 : index
    %90 = vector.load %arg12[%c0_48, %c0_49] : memref<1x1xf32, #tpu.memory_space<vmem>>, vector<1x1xf32>
    %91 = vector.extract %90[0, 0] : f32 from vector<1x1xf32>
    %92 = vector.broadcast %91 : f32 to vector<8x1xf32>
    %93 = arith.addf %89, %92 : vector<8x1xf32>
    %c0_50 = arith.constant 0 : index
    %c0_51 = arith.constant 0 : index
    %94 = vector.load %arg14[%c0_50, %c0_51] : memref<8x1xf32, #tpu.memory_space<vmem>>, vector<8x1xf32>
    tpu.vector_store %arg14[%c0_50, %c0_51], %93 {strides = array<i32>} : memref<8x1xf32, #tpu.memory_space<vmem>>, vector<8x1xf32>,
    return
  }
  func.func @transform_0(%arg0: i32) -> (i32, i32, i32) {
    %c0_i32 = arith.constant 0 : i32
    %c0_i32_0 = arith.constant 0 : i32
    %c0_i32_1 = arith.constant 0 : i32
    return %arg0, %c0_i32, %c0_i32_0 : i32, i32, i32
  }
  func.func @transform_1(%arg0: i32) -> (i32, i32) {
    %c0_i32 = arith.constant 0 : i32
    %c0_i32_0 = arith.constant 0 : i32
    %c0_i32_1 = arith.constant 0 : i32
    return %c0_i32, %c0_i32_0 : i32, i32
  }
  func.func @transform_2(%arg0: i32) -> (i32, i32) {
    %c0_i32 = arith.constant 0 : i32
    %c0_i32_0 = arith.constant 0 : i32
    %c0_i32_1 = arith.constant 0 : i32
    return %c0_i32, %c0_i32_0 : i32, i32
  }
  func.func @transform_3(%arg0: i32) -> (i32, i32) {
    %c0_i32 = arith.constant 0 : i32
    %c0_i32_0 = arith.constant 0 : i32
    %c0_i32_1 = arith.constant 0 : i32
    return %c0_i32, %c0_i32_0 : i32, i32
  }
  func.func @transform_4(%arg0: i32) -> (i32, i32) {
    %c0_i32 = arith.constant 0 : i32
    %c0_i32_0 = arith.constant 0 : i32
    %c0_i32_1 = arith.constant 0 : i32
    return %c0_i32, %c0_i32_0 : i32, i32
  }
  func.func @transform_5(%arg0: i32) -> (i32, i32) {
    %c0_i32 = arith.constant 0 : i32
    %c0_i32_0 = arith.constant 0 : i32
    %c0_i32_1 = arith.constant 0 : i32
    return %c0_i32, %c0_i32_0 : i32, i32
  }
  func.func @transform_6(%arg0: i32) -> (i32, i32) {
    %c0_i32 = arith.constant 0 : i32
    %c0_i32_0 = arith.constant 0 : i32
    %c0_i32_1 = arith.constant 0 : i32
    return %c0_i32, %c0_i32_0 : i32, i32
  }
  func.func @transform_7(%arg0: i32) -> (i32, i32) {
    %c0_i32 = arith.constant 0 : i32
    %c0_i32_0 = arith.constant 0 : i32
    %c0_i32_1 = arith.constant 0 : i32
    return %c0_i32, %c0_i32_0 : i32, i32
  }
  func.func @transform_8(%arg0: i32) -> (i32, i32) {
    %c0_i32 = arith.constant 0 : i32
    %c0_i32_0 = arith.constant 0 : i32
    %c0_i32_1 = arith.constant 0 : i32
    return %c0_i32, %c0_i32_0 : i32, i32
  }
  func.func @transform_9(%arg0: i32) -> (i32, i32) {
    %c0_i32 = arith.constant 0 : i32
    %c0_i32_0 = arith.constant 0 : i32
    %c0_i32_1 = arith.constant 0 : i32
    return %c0_i32, %c0_i32_0 : i32, i32
  }
  func.func @transform_10(%arg0: i32) -> (i32, i32) {
    %c0_i32 = arith.constant 0 : i32
    %c0_i32_0 = arith.constant 0 : i32
    %c0_i32_1 = arith.constant 0 : i32
    return %c0_i32, %c0_i32_0 : i32, i32
  }
  func.func @transform_11(%arg0: i32) -> (i32, i32) {
    %c0_i32 = arith.constant 0 : i32
    %c0_i32_0 = arith.constant 0 : i32
    %c0_i32_1 = arith.constant 0 : i32
    return %c0_i32, %c0_i32_0 : i32, i32
  }
  func.func @transform_12(%arg0: i32) -> (i32, i32) {
    %c0_i32 = arith.constant 0 : i32
    %c0_i32_0 = arith.constant 0 : i32
    return %arg0, %c0_i32 : i32, i32
  }
  func.func @transform_13(%arg0: i32) -> (i32, i32) {
    %c0_i32 = arith.constant 0 : i32
    %c0_i32_0 = arith.constant 0 : i32
    return %arg0, %c0_i32 : i32, i32
  }
}

</mosaic_0001>

<llo_original>
// kernel: hybrid_pallas.1
$region0: #{hybrid_pallas.1}
  #allocation0 [shape = 'u32[]', space=smem, size = 0x4, offset = 0x4, fixed_abs, tag = 'smem constant byte address 0x4 - core index']
  #allocation1 [shape = 'u32[144,128]{1,0:T(1,128)}', space=vmem, size = 0x12000, scoped, tag = 'internal scratch']
  #allocation2 [shape = 'f32[1,1]{1,0:T(1,128)S(1)}', space=vmem, size = 0x200, scoped, tag = 'scoped memory for hybrid_pallas.1']
  %s0 = inlined_call_operand.vmem [shape: bf16[2,16,16], index: 0, kind: input, shape index: {}]
  %s1 = inlined_call_operand.vmem [shape: f32[4,16], index: 1, kind: input, shape index: {}]
  %s2 = inlined_call_operand.vmem [shape: f32[1,16], index: 2, kind: input, shape index: {}]
  %s3 = inlined_call_operand.vmem [shape: f32[1,16], index: 3, kind: input, shape index: {}]
  %s4 = inlined_call_operand.vmem [shape: bf16[16,32], index: 4, kind: input, shape index: {}]
  %s5 = inlined_call_operand.vmem [shape: f32[1,32], index: 5, kind: input, shape index: {}]
  %s6 = inlined_call_operand.vmem [shape: bf16[32,16], index: 6, kind: input, shape index: {}]
  %s7 = inlined_call_operand.vmem [shape: f32[1,16], index: 7, kind: input, shape index: {}]
  %s8 = inlined_call_operand.vmem [shape: f32[1,16], index: 8, kind: input, shape index: {}]
  %s9 = inlined_call_operand.vmem [shape: f32[1,16], index: 9, kind: input, shape index: {}]
  %s10 = inlined_call_operand.vmem [shape: f32[16,1], index: 10, kind: input, shape index: {}]
  %s11 = inlined_call_operand.<no memory space> [shape: f32[1,1], index: 11, kind: input, shape index: {}]
  %s12 = inlined_call_operand.hbm [shape: f32[8,16], index: 12, kind: output, shape index: {0}]
  %s13 = inlined_call_operand.vmem [shape: f32[8,1], index: 13, kind: output, shape index: {1}]
  %14 = xla_tuple %s12, %s13
  %s15 = sld [smem:[#allocation0]]
  $region66: #{hybrid_pallas.1} parent=0
    _
  %s17 = ssub.s32 1, %s15
  %s18 = scalar_select 0, %s17, %s15
  %v19 = vstv %s11
  %20 = vst [vmem:[#allocation2] sm:$0x1] %v19
  $region1: #{hybrid_pallas.1} parent=0
    #allocation3 [shape = 'u8[4096]{0}', space=vmem, size = 0x1000, scoped, tag = 'output window, operand 0, single buffered']
    #allocation4 [shape = 's32[1]{0}', space=sflag, size = 0x4, scoped, tag = 'scoped memory for hybrid_pallas.1']
    %21 = vsyncpa [#allocation4], 0
    // Predicated region
    $region2: #{hybrid_pallas.1} parent=1 // pred_check
      _
    $region3: #{hybrid_pallas.1} parent=1 // pred_check_branch
      %23 = sbr.rel (0) target = $region5
    $region4: #{hybrid_pallas.1} parent=1 // pred_region
      _
    $region5: #{hybrid_pallas.1} parent=1 // pred_fallthru
      _
    // Predicated region
    $region6: #{hybrid_pallas.1} parent=1 // pred_check
      _
    $region7: #{hybrid_pallas.1} parent=1 // pred_check_branch
      %25 = sbr.rel (0) target = $region9
    $region8: #{hybrid_pallas.1} parent=1 // pred_region
      _
    $region9: #{hybrid_pallas.1} parent=1 // pred_fallthru
      _
    // Predicated region
    $region10: #{hybrid_pallas.1} parent=1 // pred_check
      _
    $region11: #{hybrid_pallas.1} parent=1 // pred_check_branch
      %27 = sbr.rel (0) target = $region13
    $region12: #{hybrid_pallas.1} parent=1 // pred_region
      _
    $region13: #{hybrid_pallas.1} parent=1 // pred_fallthru
      _
    // Predicated region
    $region14: #{hybrid_pallas.1} parent=1 // pred_check
      _
    $region15: #{hybrid_pallas.1} parent=1 // pred_check_branch
      %29 = sbr.rel (0) target = $region17
    $region16: #{hybrid_pallas.1} parent=1 // pred_region
      _
    $region17: #{hybrid_pallas.1} parent=1 // pred_fallthru
      _
    // Predicated region
    $region18: #{hybrid_pallas.1} parent=1 // pred_check
      _
    $region19: #{hybrid_pallas.1} parent=1 // pred_check_branch
      %31 = sbr.rel (0) target = $region21
    $region20: #{hybrid_pallas.1} parent=1 // pred_region
      _
    $region21: #{hybrid_pallas.1} parent=1 // pred_fallthru
      _
    // Predicated region
    $region22: #{hybrid_pallas.1} parent=1 // pred_check
      _
    $region23: #{hybrid_pallas.1} parent=1 // pred_check_branch
      %33 = sbr.rel (0) target = $region25
    $region24: #{hybrid_pallas.1} parent=1 // pred_region
      _
    $region25: #{hybrid_pallas.1} parent=1 // pred_fallthru
      _
    // Predicated region
    $region26: #{hybrid_pallas.1} parent=1 // pred_check
      _
    $region27: #{hybrid_pallas.1} parent=1 // pred_check_branch
      %35 = sbr.rel (0) target = $region29
    $region28: #{hybrid_pallas.1} parent=1 // pred_region
      _
    $region29: #{hybrid_pallas.1} parent=1 // pred_fallthru
      _
    // Predicated region
    $region30: #{hybrid_pallas.1} parent=1 // pred_check
      _
    $region31: #{hybrid_pallas.1} parent=1 // pred_check_branch
      %37 = sbr.rel (0) target = $region33
    $region32: #{hybrid_pallas.1} parent=1 // pred_region
      _
    $region33: #{hybrid_pallas.1} parent=1 // pred_fallthru
      _
    // Predicated region
    $region34: #{hybrid_pallas.1} parent=1 // pred_check
      _
    $region35: #{hybrid_pallas.1} parent=1 // pred_check_branch
      %39 = sbr.rel (0) target = $region37
    $region36: #{hybrid_pallas.1} parent=1 // pred_region
      _
    $region37: #{hybrid_pallas.1} parent=1 // pred_fallthru
      _
    // Predicated region
    $region38: #{hybrid_pallas.1} parent=1 // pred_check
      _
    $region39: #{hybrid_pallas.1} parent=1 // pred_check_branch
      %41 = sbr.rel (0) target = $region41
    $region40: #{hybrid_pallas.1} parent=1 // pred_region
      _
    $region41: #{hybrid_pallas.1} parent=1 // pred_fallthru
      _
    // Predicated region
    $region42: #{hybrid_pallas.1} parent=1 // pred_check
      _
    $region43: #{hybrid_pallas.1} parent=1 // pred_check_branch
      %43 = sbr.rel (0) target = $region45
    $region44: #{hybrid_pallas.1} parent=1 // pred_region
      _
    $region45: #{hybrid_pallas.1} parent=1 // pred_fallthru
      _
    // Predicated region
    $region46: #{hybrid_pallas.1} parent=1 // pred_check
      _
    $region47: #{hybrid_pallas.1} parent=1 // pred_check_branch
      %45 = sbr.rel (0) target = $region49
    $region48: #{hybrid_pallas.1} parent=1 // pred_region
      _
    $region49: #{hybrid_pallas.1} parent=1 // pred_fallthru
      _
    %v47 = vld [vmem:[%s1] sm:$0xf]
    %vm48 = vcmask 125952
    %v49 = vsel %vm48, %v47, 0.0
    %50 = vadd.xlane.f32.xlu0 %v49
    %v51 = vpop.xlane.xlu0 %50
    %v52 = vadd.f32 %v51, 1e-07
    %v53 = vrcp.pop %v52
    %v54 = vpack.c.bf16 %v47, %v47
    %v55 = vld [vmem:[%s0] sm:$0xf]
    %v56 = vld [vmem:[%s0 + $0x4] sm:$0xf]
    %v59 = vunpack.c.l.b16 %v55
    %v60 = vunpack.c.l.b16 %v56
    %v61 = vpack.c.b16 %v60, %v59
    %vm63 = vcmask 130048
    %v65 = vsel %vm63, %v54, 0
    %67 = vmatprep.subr.bf16.mxu0 0
    %68 = vmatpush1.bf16.msra.mxu0 %v61
    %69 = vmatprep.subr.bf16.mxu0 0
    %70 = vmatpush1.bf16.msra.mxu0 0
    %71 = vmatprep.subr.bf16.mxu0 0
    %72 = vmatpush1.bf16.msra.mxu0 0
    %73 = vmatprep.subr.bf16.mxu0 0
    %74 = vmatpush1.bf16.msra.mxu0 0
    %75 = vmatprep.subr.bf16.mxu0 0
    %76 = vmatpush1.bf16.msra.mxu0 0
    %77 = vmatprep.subr.bf16.mxu0 0
    %78 = vmatpush1.bf16.msra.mxu0 0
    %79 = vmatprep.subr.bf16.mxu0 0
    %80 = vmatpush1.bf16.msra.mxu0 0
    %81 = vmatprep.subr.bf16.mxu0 0
    %82 = vmatpush1.bf16.msra.mxu0 0
    %83 = vmatprep.subr.bf16.mxu0 0
    %84 = vmatpush1.bf16.msra.mxu0 0
    %85 = vmatprep.subr.bf16.mxu0 0
    %86 = vmatpush1.bf16.msra.mxu0 0
    %87 = vmatprep.subr.bf16.mxu0 0
    %88 = vmatpush1.bf16.msra.mxu0 0
    %89 = vmatprep.subr.bf16.mxu0 0
    %90 = vmatpush1.bf16.msra.mxu0 0
    %91 = vmatprep.subr.bf16.mxu0 0
    %92 = vmatpush1.bf16.msra.mxu0 0
    %93 = vmatprep.subr.bf16.mxu0 0
    %94 = vmatpush1.bf16.msra.mxu0 0
    %95 = vmatprep.subr.bf16.mxu0 0
    %96 = vmatpush1.bf16.msra.mxu0 0
    %97 = vmatprep.subr.bf16.mxu0 0
    %98 = vmatpush1.bf16.msra.mxu0 0
    %99 = vmatprep.mubr.bf16.mxu0 0
    %100 = vmatmul.mubr.bf16.gmra.mrb[0].mxu0 %v65
    %v101 = vpop.f32.mrb[0].mxu0
    %v102 = vadd.f32 0.0, %v101
    %v103 = vpop.f32.mrb[0].mxu0
    %v104 = vpop.f32.mrb[0].mxu0
    %v105 = vpop.f32.mrb[0].mxu0
    %106 = vdwg.mxu0
    %v107 = vmul.f32 %v102, %v53
    %108 = vst.msk [vmem:[#allocation3] sm:$0xf] %vm48, %v107
    %s109 = scalar_lea.vmem %s0, 8
    %v110 = vld [vmem:[%s109] sm:$0xf]
    %v111 = vld [vmem:[%s109 + $0x4] sm:$0xf]
    %v114 = vunpack.c.l.b16 %v110
    %v115 = vunpack.c.l.b16 %v111
    %v116 = vpack.c.b16 %v115, %v114
    %118 = vmatprep.subr.bf16.mxu0 0
    %119 = vmatpush1.bf16.msra.mxu0 %v116
    %120 = vmatprep.subr.bf16.mxu0 0
    %121 = vmatpush1.bf16.msra.mxu0 0
    %122 = vmatprep.subr.bf16.mxu0 0
    %123 = vmatpush1.bf16.msra.mxu0 0
    %124 = vmatprep.subr.bf16.mxu0 0
    %125 = vmatpush1.bf16.msra.mxu0 0
    %126 = vmatprep.subr.bf16.mxu0 0
    %127 = vmatpush1.bf16.msra.mxu0 0
    %128 = vmatprep.subr.bf16.mxu0 0
    %129 = vmatpush1.bf16.msra.mxu0 0
    %130 = vmatprep.subr.bf16.mxu0 0
    %131 = vmatpush1.bf16.msra.mxu0 0
    %132 = vmatprep.subr.bf16.mxu0 0
    %133 = vmatpush1.bf16.msra.mxu0 0
    %134 = vmatprep.subr.bf16.mxu0 0
    %135 = vmatpush1.bf16.msra.mxu0 0
    %136 = vmatprep.subr.bf16.mxu0 0
    %137 = vmatpush1.bf16.msra.mxu0 0
    %138 = vmatprep.subr.bf16.mxu0 0
    %139 = vmatpush1.bf16.msra.mxu0 0
    %140 = vmatprep.subr.bf16.mxu0 0
    %141 = vmatpush1.bf16.msra.mxu0 0
    %142 = vmatprep.subr.bf16.mxu0 0
    %143 = vmatpush1.bf16.msra.mxu0 0
    %144 = vmatprep.subr.bf16.mxu0 0
    %145 = vmatpush1.bf16.msra.mxu0 0
    %146 = vmatprep.subr.bf16.mxu0 0
    %147 = vmatpush1.bf16.msra.mxu0 0
    %148 = vmatprep.subr.bf16.mxu0 0
    %149 = vmatpush1.bf16.msra.mxu0 0
    %150 = vmatprep.mubr.bf16.mxu0 0
    %151 = vmatmul.mubr.bf16.gmra.mrb[0].mxu0 %v65
    %v152 = vpop.f32.mrb[0].mxu0
    %v153 = vadd.f32 0.0, %v152
    %v154 = vpop.f32.mrb[0].mxu0
    %v155 = vpop.f32.mrb[0].mxu0
    %v156 = vpop.f32.mrb[0].mxu0
    %157 = vdwg.mxu0
    %v158 = vmul.f32 %v153, %v53
    %159 = vst.msk [vmem:[#allocation3 + $0x4] sm:$0xf] %vm48, %v158
    %v160 = vld [vmem:[#allocation3] sm:$0xff]
    %v161 = vld [vmem:[%s2] sm:$0x1]
    %v162 = vld [vmem:[%s3] sm:$0x1]
    %v163 = vsel %vm63, %v160, 0.0
    %164 = vadd.xlane.f32.xlu0 %v163
    %v165 = vpop.xlane.xlu0 %164
    %v166 = vrcp.pop 16.0
    %v167 = vmul.f32 %v165, %v166
    %v168 = vsub.f32 %v160, %v167
    %v169 = vmul.f32 %v168, %v168
    %v170 = vsel %vm63, %v169, 0.0
    %171 = vadd.xlane.f32.xlu0 %v170
    %v172 = vpop.xlane.xlu0 %171
    %v173 = vmul.f32 %v172, %v166
    %v174 = vadd.f32 %v173, 1e-05
    %v175 = vrsqrt.pop %v174
    %v176 = vmul.f32 %v168, %v175
    %v178 = vlaneseq
    %v179 = vshrl.u32 %v178, 7
    %v180 = vsub.s32 0, %v179
    %v181 = vrot.slane %v161, %v180
    %v183 = vmul.f32 %v176, %v181
    %v185 = vlaneseq
    %v186 = vshrl.u32 %v185, 7
    %v187 = vsub.s32 0, %v186
    %v188 = vrot.slane %v162, %v187
    %v190 = vadd.f32 %v183, %v188
    %v191 = vpack.c.bf16 %v190, %v190
    %v192 = vld [vmem:[%s4] sm:$0xf]
    %v193 = vld [vmem:[%s4 + $0x4] sm:$0xf]
    %v194 = vld [vmem:[%s5] sm:$0x1]
    %v196 = vlaneseq
    %v197 = vshrl.u32 %v196, 7
    %v198 = vsub.s32 0, %v197
    %v199 = vrot.slane %v194, %v198
    %v203 = vunpack.c.l.b16 %v192
    %v204 = vunpack.c.l.b16 %v193
    %v205 = vpack.c.b16 %v204, %v203
    %v208 = vsel %vm63, %v191, 0
    %210 = vmatprep.subr.bf16.mxu0 0
    %211 = vmatpush1.bf16.msra.mxu0 %v205
    %212 = vmatprep.subr.bf16.mxu0 0
    %213 = vmatpush1.bf16.msra.mxu0 0
    %214 = vmatprep.subr.bf16.mxu0 0
    %215 = vmatpush1.bf16.msra.mxu0 0
    %216 = vmatprep.subr.bf16.mxu0 0
    %217 = vmatpush1.bf16.msra.mxu0 0
    %218 = vmatprep.subr.bf16.mxu0 0
    %219 = vmatpush1.bf16.msra.mxu0 0
    %220 = vmatprep.subr.bf16.mxu0 0
    %221 = vmatpush1.bf16.msra.mxu0 0
    %222 = vmatprep.subr.bf16.mxu0 0
    %223 = vmatpush1.bf16.msra.mxu0 0
    %224 = vmatprep.subr.bf16.mxu0 0
    %225 = vmatpush1.bf16.msra.mxu0 0
    %226 = vmatprep.subr.bf16.mxu0 0
    %227 = vmatpush1.bf16.msra.mxu0 0
    %228 = vmatprep.subr.bf16.mxu0 0
    %229 = vmatpush1.bf16.msra.mxu0 0
    %230 = vmatprep.subr.bf16.mxu0 0
    %231 = vmatpush1.bf16.msra.mxu0 0
    %232 = vmatprep.subr.bf16.mxu0 0
    %233 = vmatpush1.bf16.msra.mxu0 0
    %234 = vmatprep.subr.bf16.mxu0 0
    %235 = vmatpush1.bf16.msra.mxu0 0
    %236 = vmatprep.subr.bf16.mxu0 0
    %237 = vmatpush1.bf16.msra.mxu0 0
    %238 = vmatprep.subr.bf16.mxu0 0
    %239 = vmatpush1.bf16.msra.mxu0 0
    %240 = vmatprep.subr.bf16.mxu0 0
    %241 = vmatpush1.bf16.msra.mxu0 0
    %242 = vmatprep.mubr.bf16.mxu0 0
    %243 = vmatmul.mubr.bf16.gmra.mrb[0].mxu0 %v208
    %v244 = vpop.f32.mrb[0].mxu0
    %v245 = vadd.f32 %v199, %v244
    %v246 = vpop.f32.mrb[0].mxu0
    %v247 = vpop.f32.mrb[0].mxu0
    %v248 = vpop.f32.mrb[0].mxu0
    %249 = vdwg.mxu0
    %v250 = vmul.f32 %v245, 0.5
    %v251 = vmul.f32 %v245, 0.70710677
    %v252 = verf.f32.pop %v251
    %v253 = vadd.f32 %v252, 1.0
    %v254 = vmul.f32 %v250, %v253
    %v255 = vpack.c.bf16 %v254, %v254
    %v256 = vld [vmem:[%s6] sm:$0xf]
    %v257 = vld [vmem:[%s6 + $0x4] sm:$0xf]
    %v258 = vld [vmem:[%s6 + $0x8] sm:$0xf]
    %v259 = vld [vmem:[%s6 + $0xc] sm:$0xf]
    %v260 = vld [vmem:[%s7] sm:$0x1]
    %v262 = vlaneseq
    %v263 = vshrl.u32 %v262, 7
    %v264 = vsub.s32 0, %v263
    %v265 = vrot.slane %v260, %v264
    %v271 = vunpack.c.l.b16 %v256
    %v272 = vunpack.c.l.b16 %v257
    %v273 = vunpack.c.l.b16 %v258
    %v274 = vunpack.c.l.b16 %v259
    %v275 = vpack.c.b16 %v272, %v271
    %v276 = vpack.c.b16 %v274, %v273
    %vm279 = vcmask 261120
    %v281 = vsel %vm279, %v255, 0
    %283 = vmatprep.subr.bf16.mxu0 0
    %284 = vmatpush1.bf16.msra.mxu0 %v275
    %285 = vmatprep.subr.bf16.mxu0 0
    %286 = vmatpush1.bf16.msra.mxu0 %v276
    %287 = vmatprep.subr.bf16.mxu0 0
    %288 = vmatpush1.bf16.msra.mxu0 0
    %289 = vmatprep.subr.bf16.mxu0 0
    %290 = vmatpush1.bf16.msra.mxu0 0
    %291 = vmatprep.subr.bf16.mxu0 0
    %292 = vmatpush1.bf16.msra.mxu0 0
    %293 = vmatprep.subr.bf16.mxu0 0
    %294 = vmatpush1.bf16.msra.mxu0 0
    %295 = vmatprep.subr.bf16.mxu0 0
    %296 = vmatpush1.bf16.msra.mxu0 0
    %297 = vmatprep.subr.bf16.mxu0 0
    %298 = vmatpush1.bf16.msra.mxu0 0
    %299 = vmatprep.subr.bf16.mxu0 0
    %300 = vmatpush1.bf16.msra.mxu0 0
    %301 = vmatprep.subr.bf16.mxu0 0
    %302 = vmatpush1.bf16.msra.mxu0 0
    %303 = vmatprep.subr.bf16.mxu0 0
    %304 = vmatpush1.bf16.msra.mxu0 0
    %305 = vmatprep.subr.bf16.mxu0 0
    %306 = vmatpush1.bf16.msra.mxu0 0
    %307 = vmatprep.subr.bf16.mxu0 0
    %308 = vmatpush1.bf16.msra.mxu0 0
    %309 = vmatprep.subr.bf16.mxu0 0
    %310 = vmatpush1.bf16.msra.mxu0 0
    %311 = vmatprep.subr.bf16.mxu0 0
    %312 = vmatpush1.bf16.msra.mxu0 0
    %313 = vmatprep.subr.bf16.mxu0 0
    %314 = vmatpush1.bf16.msra.mxu0 0
    %315 = vmatprep.mubr.bf16.mxu0 0
    %316 = vmatmul.mubr.bf16.gmra.mrb[0].mxu0 %v281
    %v317 = vpop.f32.mrb[0].mxu0
    %v318 = vadd.f32 %v265, %v317
    %v319 = vpop.f32.mrb[0].mxu0
    %v320 = vpop.f32.mrb[0].mxu0
    %v321 = vpop.f32.mrb[0].mxu0
    %322 = vdwg.mxu0
    %v323 = vld [vmem:[%s8] sm:$0x1]
    %v324 = vld [vmem:[%s9] sm:$0x1]
    %v325 = vsel %vm63, %v318, 0.0
    %326 = vadd.xlane.f32.xlu0 %v325
    %v327 = vpop.xlane.xlu0 %326
    %v328 = vmul.f32 %v327, %v166
    %v329 = vsub.f32 %v318, %v328
    %v330 = vmul.f32 %v329, %v329
    %v331 = vsel %vm63, %v330, 0.0
    %332 = vadd.xlane.f32.xlu0 %v331
    %v333 = vpop.xlane.xlu0 %332
    %v334 = vmul.f32 %v333, %v166
    %v335 = vadd.f32 %v334, 1e-05
    %v336 = vrsqrt.pop %v335
    %v337 = vmul.f32 %v329, %v336
    %v339 = vlaneseq
    %v340 = vshrl.u32 %v339, 7
    %v341 = vsub.s32 0, %v340
    %v342 = vrot.slane %v323, %v341
    %v344 = vmul.f32 %v337, %v342
    %v346 = vlaneseq
    %v347 = vshrl.u32 %v346, 7
    %v348 = vsub.s32 0, %v347
    %v349 = vrot.slane %v324, %v348
    %v351 = vadd.f32 %v344, %v349
    %v352 = vld [vmem:[%s10] sm:$0xff]
    %v353 = vld [vmem:[%s10 + $0x8] sm:$0xff]
    %v354 = vld [vmem:[#allocation2] sm:$0x1]
    %s355 = vtos %v354
    %v356 = vstv %s355
    %v358 = vsel %vm63, %v351, 0
    %360 = vmatprep.subr.mxu0 0.0
    %361 = vmatpush1.msra.mxu0 %v352
    %362 = vmatprep.subr.mxu0 0.0
    %363 = vmatpush1.msra.mxu0 %v353
    %364 = vmatprep.subr.mxu0 0.0
    %365 = vmatpush1.msra.mxu0 0.0
    %366 = vmatprep.subr.mxu0 0.0
    %367 = vmatpush1.msra.mxu0 0.0
    %368 = vmatprep.subr.mxu0 0.0
    %369 = vmatpush1.msra.mxu0 0.0
    %370 = vmatprep.subr.mxu0 0.0
    %371 = vmatpush1.msra.mxu0 0.0
    %372 = vmatprep.subr.mxu0 0.0
    %373 = vmatpush1.msra.mxu0 0.0
    %374 = vmatprep.subr.mxu0 0.0
    %375 = vmatpush1.msra.mxu0 0.0
    %376 = vmatprep.subr.mxu0 0.0
    %377 = vmatpush1.msra.mxu0 0.0
    %378 = vmatprep.subr.mxu0 0.0
    %379 = vmatpush1.msra.mxu0 0.0
    %380 = vmatprep.subr.mxu0 0.0
    %381 = vmatpush1.msra.mxu0 0.0
    %382 = vmatprep.subr.mxu0 0.0
    %383 = vmatpush1.msra.mxu0 0.0
    %384 = vmatprep.subr.mxu0 0.0
    %385 = vmatpush1.msra.mxu0 0.0
    %386 = vmatprep.subr.mxu0 0.0
    %387 = vmatpush1.msra.mxu0 0.0
    %388 = vmatprep.subr.mxu0 0.0
    %389 = vmatpush1.msra.mxu0 0.0
    %390 = vmatprep.subr.mxu0 0.0
    %391 = vmatpush1.msra.mxu0 0.0
    %392 = vmatprep.subr.mxu0 0.0
    %393 = vmatpush1.msra.mxu0 0.0
    %394 = vmatprep.subr.mxu0 0.0
    %395 = vmatpush1.msra.mxu0 0.0
    %396 = vmatprep.subr.mxu0 0.0
    %397 = vmatpush1.msra.mxu0 0.0
    %398 = vmatprep.subr.mxu0 0.0
    %399 = vmatpush1.msra.mxu0 0.0
    %400 = vmatprep.subr.mxu0 0.0
    %401 = vmatpush1.msra.mxu0 0.0
    %402 = vmatprep.subr.mxu0 0.0
    %403 = vmatpush1.msra.mxu0 0.0
    %404 = vmatprep.subr.mxu0 0.0
    %405 = vmatpush1.msra.mxu0 0.0
    %406 = vmatprep.subr.mxu0 0.0
    %407 = vmatpush1.msra.mxu0 0.0
    %408 = vmatprep.subr.mxu0 0.0
    %409 = vmatpush1.msra.mxu0 0.0
    %410 = vmatprep.subr.mxu0 0.0
    %411 = vmatpush1.msra.mxu0 0.0
    %412 = vmatprep.subr.mxu0 0.0
    %413 = vmatpush1.msra.mxu0 0.0
    %414 = vmatprep.subr.mxu0 0.0
    %415 = vmatpush1.msra.mxu0 0.0
    %416 = vmatprep.subr.mxu0 0.0
    %417 = vmatpush1.msra.mxu0 0.0
    %418 = vmatprep.subr.mxu0 0.0
    %419 = vmatpush1.msra.mxu0 0.0
    %420 = vmatprep.subr.mxu0 0.0
    %421 = vmatpush1.msra.mxu0 0.0
    %422 = vmatprep.subr.mxu0 0.0
    %423 = vmatpush1.msra.mxu0 0.0
    %424 = vmatprep.mubr.f32.mxu0 0.0
    %425 = vmatmul.mubr.f32.gmra.mrb[0].mxu0 %v358
    %v426 = vpop.f32.mrb[0].mxu0
    %v427 = vadd.f32 %v356, %v426
    %v428 = vpop.f32.mrb[0].mxu0
    %429 = vdwg.mxu0
    %vm430 = vcmask 7168
    %431 = vst.msk [vmem:[%s13] sm:$0xff] %vm430, %v427
    // Predicated region
    $region50: #{hybrid_pallas.1} parent=1 // pred_check
      _
    $region51: #{hybrid_pallas.1} parent=1 // pred_check_branch
      %433 = sbr.rel (0) target = $region53
    $region52: #{hybrid_pallas.1} parent=1 // pred_region
      %s435 = ssub.s32 128, 128
      %436 = vsyncadd [#allocation4], %s435
      %s438 = sshll.u32 [#allocation3], 4
      %s439 = int_to_ptr.vmem [resolvable:$true] %s438
      %441 = dma.vmem_to_hbm [thread:$0]  %s439, 128, %s12, [#allocation4]
    $region53: #{hybrid_pallas.1} parent=1 // pred_fallthru
      _
    // Predicated region
    $region54: #{hybrid_pallas.1} parent=1 // pred_check
      _
    $region55: #{hybrid_pallas.1} parent=1 // pred_check_branch
      %443 = sbr.rel (0) target = $region57
    $region56: #{hybrid_pallas.1} parent=1 // pred_region
      _
    $region57: #{hybrid_pallas.1} parent=1 // pred_fallthru
      _
    // Predicated region
    $region58: #{hybrid_pallas.1} parent=1 // pred_check
      _
    $region59: #{hybrid_pallas.1} parent=1 // pred_check_branch
      %445 = sbr.rel (0) target = $region61
    $region60: #{hybrid_pallas.1} parent=1 // pred_region
      %446 = dma.done [#allocation4], 128
    $region61: #{hybrid_pallas.1} parent=1 // pred_fallthru
      _
    // Predicated region
    $region62: #{hybrid_pallas.1} parent=1 // pred_check
      _
    $region63: #{hybrid_pallas.1} parent=1 // pred_check_branch
      %448 = sbr.rel (0) target = $region65
    $region64: #{hybrid_pallas.1} parent=1 // pred_region
      _
    $region65: #{hybrid_pallas.1} parent=1 // pred_fallthru
      _
    %449 = vsyncpa [#allocation4], 1

</llo_original>
